<compile_context>
chip_gen: v7x
topology: tpu7x:2x2x1
jax: 0.10.0
libtpu: 0.0.40
codegen_flags: <defaults>
</compile_context>

<pallas_src>
import jax
import jax.numpy as jnp
from jax import lax
from jax.experimental import pallas as pl
from jax.experimental.pallas import tpu as pltpu


def _round_up(a, m):
    return ((a + m - 1) // m) * m


def _round_down(a, m):
    return (a // m) * m


def _block_vmem_bytes(rows, cols, itemsize):
    # VMEM buffers pad the minor dims to the native (8, 128) tiling.
    return _round_up(max(int(rows), 1), 8) * _round_up(max(int(cols), 1), 128) * int(itemsize)


def _tpu_vmem_budget():
    """(total working-set budget, scoped vmem_limit cap) -- generation aware."""
    vmem_cap = 128 << 20                       # v5e / v6e physical VMEM per TC
    try:
        vmem_cap = int(pltpu.get_tpu_info().vmem_capacity_bytes)
    except Exception:
        pass                                   # fall back to a budget that still fits v7x
    if vmem_cap <= (64 << 20):                 # v7x-class: 64 MiB per TensorCore
        return 30 << 20, 40 << 20
    return 56 << 20, 64 << 20                  # v5e / v6e: 128 MiB physical


def _plan(batch, feat, itemsize, budget):
    """Pick a tiling.

    Returns ("rowsum", tb, None, est_bytes)  -- full-D row tiles, lane-dense out
         or ("dsplit", tb, tk,  est_bytes)  -- split reduction over D.
    """
    d_pad = _round_up(feat, 128)
    # Per batch-row cost: double-buffered x row + ~3 block-sized f32 temporaries
    # (upcast / weight broadcast / product) + 8-sublane-padded lane-dense out.
    row_cost = 2 * d_pad * itemsize + 3 * 4 * d_pad + 2 * 8 * itemsize
    # Resident (1, D) weight: 8-sublane padded, double-buffered, + f32 upcast temp.
    weight_cost = 8 * d_pad * (2 * itemsize + 4)
    avail = budget - weight_cost
    rows_fit = avail // row_cost if avail > 0 else 0

    if rows_fit >= min(batch, 128):
        cap = rows_fit
        if batch >= 256:
            # Guarantee >= 2 row tiles so ("parallel",) shards across v7x's 2 TCs.
            cap = min(cap, max(_round_down(pl.cdiv(batch, 2), 128), 128))
        tb = batch if batch <= cap else max(_round_down(cap, 128), 128)
        est = tb * row_cost + weight_cost
        return "rowsum", tb, None, est

    # D too large for a >= 128-row full-D tile: split the reduction dimension.
    tb = batch if batch <= 128 else 128
    tb_pad = _round_up(tb, 8)
    # Fixed (not K-tiled): (tb, 1) output (double-buffered, lane-padded) + f32 acc.
    fixed = 2 * _block_vmem_bytes(tb, 1, itemsize) + _block_vmem_bytes(tb, 1, 4)
    # Per K-lane cost: double-buffered x column + ~5 f32/i32 block temporaries
    # (upcast, broadcast, product, iota, mask-select) + streamed weight column.
    col_cost = tb_pad * (2 * itemsize + 5 * 4) + 8 * (2 * itemsize + 4)
    avail_k = budget - fixed
    tk = _round_down(max(avail_k // col_cost, 128), 128)
    tk = min(tk, max(_round_down(d_pad, 128), 128))
    if tk >= feat:
        tk = feat
    est = fixed + tk * col_cost + 8 * _round_up(tk, 128) * (2 * itemsize + 4)
    return "dsplit", tb, tk, est


def _linear_rowsum_kernel(x_ref, w_ref, b_ref, o_ref):
    # x_ref: (tb, D) streamed batch tile; w_ref: (1, D) VMEM-resident weight;
    # b_ref: (1,) SMEM scalar bias; o_ref: (1, 1, tb) lane-dense output row.
    x = x_ref[...].astype(jnp.float32)
    w = w_ref[...].astype(jnp.float32)             # broadcasts over tb sublanes
    y = jnp.sum(x * w, axis=-1) + b_ref[0]         # VPU mul + XLU lane reduce, f32
    o_ref[...] = y.reshape(1, 1, -1).astype(o_ref.dtype)


def _make_dsplit_kernel(feat, tk):
    need_mask = (feat % tk) != 0

    def kernel(x_ref, w_ref, b_ref, o_ref, acc_ref):
        # x_ref: (tb, tk); w_ref: (1, tk); b_ref: (1,) SMEM; o_ref: (tb, 1);
        # acc_ref: (tb, 1) f32 scratch, resident across the K grid axis.
        k = pl.program_id(1)

        @pl.when(k == 0)
        def _init():
            acc_ref[...] = jnp.zeros_like(acc_ref)

        x = x_ref[...].astype(jnp.float32)
        w = w_ref[...].astype(jnp.float32)
        prod = x * w
        if need_mask:
            # Partial last K tile: OOB lanes hold unspecified pad data -> zero them.
            lane = lax.broadcasted_iota(jnp.int32, prod.shape, dimension=1)
            prod = jnp.where(lane + k * tk < feat, prod, 0.0)
        acc_ref[...] += jnp.sum(prod, axis=-1, keepdims=True)

        @pl.when(k == pl.num_programs(1) - 1)
        def _finalize():
            o_ref[...] = (acc_ref[...] + b_ref[0]).astype(o_ref.dtype)

    return kernel


def net_forward(x, weight, bias, *, total_vmem_budget_bytes=None, vmem_limit_cap_bytes=None):
    """x: (B, D), weight: (1, D) (PyTorch nn.Linear layout), bias: (1,) -> (B, 1)."""
    B, D = x.shape
    assert weight.shape == (1, D) and bias.shape == (1,)
    itemsize = jnp.dtype(x.dtype).itemsize

    budget, cap = _tpu_vmem_budget()
    if total_vmem_budget_bytes is not None:
        budget = int(total_vmem_budget_bytes)
    if vmem_limit_cap_bytes is not None:
        cap = int(vmem_limit_cap_bytes)

    bias_f32 = bias.astype(jnp.float32)   # SMEM scalar; added in f32 either way

    mode, tb, tk, est = _plan(B, D, itemsize, budget)
    vmem_limit = int(min(cap, max(est + (4 << 20), 16 << 20)))

    if mode == "rowsum":
        num_tiles = pl.cdiv(B, tb)
        out = pl.pallas_call(
            _linear_rowsum_kernel,
            out_shape=jax.ShapeDtypeStruct((num_tiles, 1, tb), x.dtype),
            grid_spec=pltpu.PrefetchScalarGridSpec(
                num_scalar_prefetch=0,
                grid=(num_tiles,),
                in_specs=[
                    pl.BlockSpec((tb, D), lambda i: (i, 0)),             # streamed x tiles
                    pl.BlockSpec((1, D), lambda i: (0, 0)),              # weight: resident
                    pl.BlockSpec(memory_space=pltpu.MemorySpace.SMEM),   # bias: SMEM scalar
                ],
                out_specs=pl.BlockSpec((1, 1, tb), lambda i: (i, 0, 0)),  # lane-dense rows
            ),
            compiler_params=pltpu.CompilerParams(
                dimension_semantics=("parallel",),   # v7x: shard batch tiles over 2 TCs
                vmem_limit_bytes=vmem_limit,
            ),
        )(x, weight, bias_f32)
        # (num_tiles, 1, tb) in row-major is exactly batch order; rows >= B come from
        # the padded last tile (unspecified data) and are dropped here -- benign.
        return out.reshape(num_tiles * tb, 1)[:B]

    # ---- dsplit: huge D, split the reduction dimension ----
    num_row_tiles = pl.cdiv(B, tb)
    num_k = pl.cdiv(D, tk)
    out = pl.pallas_call(
        _make_dsplit_kernel(D, tk),
        out_shape=jax.ShapeDtypeStruct((B, 1), x.dtype),
        grid_spec=pltpu.PrefetchScalarGridSpec(
            num_scalar_prefetch=0,
            grid=(num_row_tiles, num_k),
            in_specs=[
                pl.BlockSpec((tb, tk), lambda i, k: (i, k)),             # streamed x tiles
                pl.BlockSpec((1, tk), lambda i, k: (0, k)),              # streamed weight cols
                pl.BlockSpec(memory_space=pltpu.MemorySpace.SMEM),       # bias: SMEM scalar
            ],
            out_specs=pl.BlockSpec((tb, 1), lambda i, k: (i, 0)),        # resident across k
            scratch_shapes=[pltpu.VMEM((tb, 1), jnp.float32)],           # f32 accumulator
        ),
        compiler_params=pltpu.CompilerParams(
            dimension_semantics=("parallel", "arbitrary"),
            vmem_limit_bytes=vmem_limit,
        ),
    )(x, weight, bias_f32)
    return out


if __name__ == "__main__":
    key = jax.random.PRNGKey(0)
    kx, kw, kb = jax.random.split(key, 3)

    batch, input_dim = 8, 32

    # PyTorch nn.Linear default init: U(-1/sqrt(fan_in), 1/sqrt(fan_in)).
    bound = 1.0 / float(input_dim) ** 0.5
    weight = jax.random.uniform(kw, (1, input_dim), jnp.float32, -bound, bound)
    bias = jax.random.uniform(kb, (1,), jnp.float32, -bound, bound)
    x = jax.random.normal(kx, (batch, input_dim), jnp.float32)

    out = jax.block_until_ready(net_forward(x, weight, bias))
    ref = x @ weight.T + bias
    assert out.shape == (batch, 1), out.shape
    assert jnp.allclose(out, ref, atol=1e-5, rtol=1e-5), float(jnp.max(jnp.abs(out - ref)))

    # Exercise the other code paths at small shapes by forcing tiny VMEM budgets.
    # 1) Multi-tile lane-dense path (partial last row tile, forced >=2 tiles).
    k2, k3 = jax.random.split(kx)
    x2 = jax.random.normal(k2, (600, 128), jnp.float32)
    w2 = jax.random.uniform(kw, (1, 128), jnp.float32, -0.1, 0.1)
    out2 = jax.block_until_ready(
        net_forward(x2, w2, bias, total_vmem_budget_bytes=512 * 1024))
    assert out2.shape == (600, 1)
    assert jnp.allclose(out2, x2 @ w2.T + bias, atol=1e-4, rtol=1e-4)

    # 2) D-split reduction path (partial last K tile -> lane masking, partial row tile).
    x3 = jax.random.normal(k3, (200, 400), jnp.float32)
    w3 = jax.random.uniform(kb, (1, 400), jnp.float32, -0.05, 0.05)
    out3 = jax.block_until_ready(
        net_forward(x3, w3, bias, total_vmem_budget_bytes=768 * 1024))
    assert out3.shape == (200, 1)
    assert jnp.allclose(out3, x3 @ w3.T + bias, atol=1e-4, rtol=1e-4)

    print("KERNEL_OK")
</pallas_src>

<mosaic_0001>
module attributes {stable_mosaic.version = 11 : i64} {
  func.func @_linear_rowsum_kernel(%arg0: i32, %arg1: memref<8x32xf32, #tpu.memory_space<vmem>>, %arg2: memref<1x32xf32, #tpu.memory_space<vmem>>, %arg3: memref<1xf32, #tpu.memory_space<smem>>, %arg4: memref<1x1x8xf32, #tpu.memory_space<vmem>>) attributes {dimension_semantics = [#tpu.dimension_semantics<parallel>], iteration_bounds = array<i64: 1>, scalar_prefetch = 0 : i64, scratch_operands = 0 : i64, tpu.core_type = #tpu.core_type<tc>, window_params = [{transform_indices = @transform_0, window_bounds = array<i64: 8, 32>}, {pipeline_mode = #tpu.pipeline_mode<synchronous>, transform_indices = @transform_1, window_bounds = array<i64: 1, 32>}, {transform_indices = @transform_2, window_bounds = array<i64: 1>}, {transform_indices = @transform_3, window_bounds = array<i64: 1, 1, 8>}]} {
    %c0 = arith.constant 0 : index
    %c0_0 = arith.constant 0 : index
    %0 = vector.load %arg1[%c0, %c0_0] : memref<8x32xf32, #tpu.memory_space<vmem>>, vector<8x32xf32>
    %c0_1 = arith.constant 0 : index
    %c0_2 = arith.constant 0 : index
    %1 = vector.load %arg2[%c0_1, %c0_2] : memref<1x32xf32, #tpu.memory_space<vmem>>, vector<1x32xf32>
    %2 = vector.broadcast %1 : vector<1x32xf32> to vector<8x32xf32>
    %3 = arith.mulf %0, %2 : vector<8x32xf32>
    %cst = arith.constant dense<0.000000e+00> : vector<8xf32>
    %4 = vector.multi_reduction <add>, %3, %cst [1] : vector<8x32xf32> to vector<8xf32>
    %c0_3 = arith.constant 0 : index
    %5 = memref.load %arg3[%c0_3] : memref<1xf32, #tpu.memory_space<smem>>
    %6 = vector.broadcast %5 : f32 to vector<8xf32>
    %7 = arith.addf %4, %6 : vector<8xf32>
    %8 = vector.shape_cast %7 : vector<8xf32> to vector<1x1x8xf32>
    %c0_4 = arith.constant 0 : index
    %c0_5 = arith.constant 0 : index
    %c0_6 = arith.constant 0 : index
    %9 = vector.load %arg4[%c0_4, %c0_5, %c0_6] : memref<1x1x8xf32, #tpu.memory_space<vmem>>, vector<1x1x8xf32>
    tpu.vector_store %arg4[%c0_4, %c0_5, %c0_6], %8 {strides = array<i32>} : memref<1x1x8xf32, #tpu.memory_space<vmem>>, vector<1x1x8xf32>,
    return
  }
  func.func @transform_0(%arg0: i32) -> (i32, i32) {
    %c0_i32 = arith.constant 0 : i32
    %c0_i32_0 = arith.constant 0 : i32
    return %arg0, %c0_i32 : i32, i32
  }
  func.func @transform_1(%arg0: i32) -> (i32, i32) {
    %c0_i32 = arith.constant 0 : i32
    %c0_i32_0 = arith.constant 0 : i32
    %c0_i32_1 = arith.constant 0 : i32
    return %c0_i32, %c0_i32_0 : i32, i32
  }
  func.func @transform_2(%arg0: i32) -> i32 {
    %c0_i32 = arith.constant 0 : i32
    %c0_i32_0 = arith.constant 0 : i32
    return %c0_i32 : i32
  }
  func.func @transform_3(%arg0: i32) -> (i32, i32, i32) {
    %c0_i32 = arith.constant 0 : i32
    %c0_i32_0 = arith.constant 0 : i32
    %c0_i32_1 = arith.constant 0 : i32
    return %arg0, %c0_i32, %c0_i32_0 : i32, i32, i32
  }
}

</mosaic_0001>

<llo_original>
// kernel: tpu_custom_call.1
$region0: #{tpu_custom_call.1}
  #allocation0 [shape = 'u32[]', space=smem, size = 0x4, offset = 0x4, fixed_abs, tag = 'smem constant byte address 0x4 - core index']
  #allocation1 [shape = 'u32[144,128]{1,0:T(1,128)}', space=vmem, size = 0x12000, scoped, tag = 'internal scratch']
  #allocation2 [shape = 'f32[1]{0:T(128)S(6)}', space=smem, size = 0x200, scoped, tag = 'scoped memory for tpu_custom_call.1']
  %s0 = inlined_call_operand.hbm [shape: f32[8,32], index: 0, kind: input, shape index: {}]
  %s1 = inlined_call_operand.vmem [shape: f32[1,32], index: 1, kind: input, shape index: {}]
  %s2 = inlined_call_operand.<no memory space> [shape: f32[1], index: 2, kind: input, shape index: {}]
  %s3 = inlined_call_operand.hbm [shape: f32[1,1,8], index: 3, kind: output, shape index: {}]
  %s4 = sld [smem:[#allocation0]]
  $region26: #{tpu_custom_call.1} parent=0
    _
  %s6 = ssub.s32 1, %s4
  %s7 = scalar_select 0, %s6, %s4
  %8 = sst [smem:[#allocation2]] %s2
  $region1: #{tpu_custom_call.1} parent=0
    #allocation3 [shape = 'u8[4096]{0}', space=vmem, size = 0x1000, scoped, tag = 'input window, operand 0, single buffered']
    #allocation4 [shape = 's32[1]{0}', space=sflag, size = 0x4, scoped, tag = 'scoped memory for tpu_custom_call.1']
    #allocation5 [shape = 's32[1]{0}', space=sflag, size = 0x4, scoped, tag = 'scoped memory for tpu_custom_call.1']
    #allocation6 [shape = 'u8[512]{0}', space=vmem, size = 0x400, scoped, tag = 'output window, operand 0, single buffered']
    %9 = vsyncpa [#allocation4], 0
    %10 = vsyncpa [#allocation5], 0
    // Predicated region
    $region2: #{tpu_custom_call.1} parent=1 // pred_check
      _
    $region3: #{tpu_custom_call.1} parent=1 // pred_check_branch
      %12 = sbr.rel (0) target = $region5
    $region4: #{tpu_custom_call.1} parent=1 // pred_region
      %s14 = ssub.s32 128, 128
      %15 = vsyncadd [#allocation4], %s14
      %s17 = sshll.u32 [#allocation3], 4
      %s18 = int_to_ptr.vmem [resolvable:$true] %s17
      %20 = dma.hbm_to_vmem [thread:$0]  %s0, 128, %s18, [#allocation4]
    $region5: #{tpu_custom_call.1} parent=1 // pred_fallthru
      _
    // Predicated region
    $region6: #{tpu_custom_call.1} parent=1 // pred_check
      _
    $region7: #{tpu_custom_call.1} parent=1 // pred_check_branch
      %22 = sbr.rel (0) target = $region9
    $region8: #{tpu_custom_call.1} parent=1 // pred_region
      _
    $region9: #{tpu_custom_call.1} parent=1 // pred_fallthru
      _
    // Predicated region
    $region10: #{tpu_custom_call.1} parent=1 // pred_check
      _
    $region11: #{tpu_custom_call.1} parent=1 // pred_check_branch
      %24 = sbr.rel (0) target = $region13
    $region12: #{tpu_custom_call.1} parent=1 // pred_region
      _
    $region13: #{tpu_custom_call.1} parent=1 // pred_fallthru
      _
    // Predicated region
    $region14: #{tpu_custom_call.1} parent=1 // pred_check
      _
    $region15: #{tpu_custom_call.1} parent=1 // pred_check_branch
      %26 = sbr.rel (0) target = $region17
    $region16: #{tpu_custom_call.1} parent=1 // pred_region
      %27 = dma.done [#allocation4], 128
    $region17: #{tpu_custom_call.1} parent=1 // pred_fallthru
      _
    %v28 = vld [vmem:[#allocation3] sm:$0xff]
    %v29 = vld [vmem:[%s1] sm:$0x1]
    %v31 = vlaneseq
    %v32 = vshrl.u32 %v31, 7
    %v33 = vsub.s32 0, %v32
    %v34 = vrot.slane %v29, %v33
    %v36 = vmul.f32 %v28, %v34
    %vm37 = vcmask 261120
    %v38 = vsel %vm37, %v36, 0.0
    %39 = vadd.xlane.f32.xlu0 %v38
    %v40 = vpop.xlane.xlu0 %39
    %s41 = sld [smem:[#allocation2]]
    %v42 = vstv %s41
    %v43 = vadd.f32 %v40, %v42
    %v45 = vlaneseq
    %v46 = vand.u32 %v45, 127
    %v47 = vlaneseq
    %v48 = vshrl.u32 %v47, 7
    %v49 = vsub.s32 %v46, %v48
    %v50 = vrot.slane %v43, %v49
    %vm52 = vcmask 57344
    %53 = vst.msk [vmem:[#allocation6] sm:$0x1] %vm52, %v50
    // Predicated region
    $region18: #{tpu_custom_call.1} parent=1 // pred_check
      _
    $region19: #{tpu_custom_call.1} parent=1 // pred_check_branch
      %55 = sbr.rel (0) target = $region21
    $region20: #{tpu_custom_call.1} parent=1 // pred_region
      %s57 = ssub.s32 16, 16
      %58 = vsyncadd [#allocation5], %s57
      %s60 = sshll.u32 [#allocation6], 4
      %s61 = int_to_ptr.vmem [resolvable:$true] %s60
      %63 = dma.vmem_to_hbm [thread:$0]  %s61, 16, %s3, [#allocation5]
    $region21: #{tpu_custom_call.1} parent=1 // pred_fallthru
      _
    // Predicated region
    $region22: #{tpu_custom_call.1} parent=1 // pred_check
      _
    $region23: #{tpu_custom_call.1} parent=1 // pred_check_branch
      %65 = sbr.rel (0) target = $region25
    $region24: #{tpu_custom_call.1} parent=1 // pred_region
      %66 = dma.done [#allocation5], 16
    $region25: #{tpu_custom_call.1} parent=1 // pred_fallthru
      _
    %67 = vsyncpa [#allocation4], 1
    %68 = vsyncpa [#allocation5], 1

</llo_original>
